<compile_context>
chip_gen: v7x
topology: tpu7x:2x2x1
jax: 0.10.0
libtpu: 0.0.40
codegen_flags: <defaults>
</compile_context>

<pallas_src>
import functools

import jax
import jax.numpy as jnp
from jax.experimental import pallas as pl
from jax.experimental.pallas import tpu as pltpu


def _age_regressor_kernel(total_b, x_ref, w1e_ref, b1_ref, w2_ref, out_ref):
    """One grid step processes one batch tile.

    x_ref:   (bt, C*T, HW)  features, native channel-major layout (no transpose)
    w1e_ref: (128, C*T)     1x1-conv weight expanded over T, pre-scaled by 1/T
    b1_ref:  (128, 1)       conv bias column (broadcasts over HW lanes)
    w2_ref:  (128, 1)       final linear weight column, pre-scaled by 1/(H*W)
    out_ref: (1, bt)        lane-dense output row for this tile
    """
    bt = x_ref.shape[0]                                   # static tile size
    # Valid samples in this tile (last tile may be ragged; beyond-bound block
    # rows are never touched).
    n_valid = jnp.minimum(bt, total_b - pl.program_id(0) * bt)
    # Hoisted lane-iota used to scatter each sample's scalar into its lane.
    lane_ids = jax.lax.broadcasted_iota(jnp.int32, (1, bt), 1)

    def body(b, acc):
        x_b = x_ref[b]                                    # (C*T, HW)
        # 1x1 conv + temporal mean in one MXU matmul over K = C*T.
        h = jnp.dot(w1e_ref[...], x_b,
                    preferred_element_type=jnp.float32)   # (128, HW) f32
        h = jnp.maximum(h + b1_ref[...], 0.0)             # bias + ReLU
        # Spatial mean + Linear(128 -> 1) folded: sum_{k,hw} w2s[k] * h[k,hw]
        col = jnp.sum(h * w2_ref[...], axis=1, keepdims=True)   # (128, 1) lane reduce
        val = jnp.sum(col, axis=0, keepdims=True)                # (1, 1) sublane reduce
        # Scatter the scalar into lane b of the accumulator (pure VPU select).
        return acc + jnp.where(lane_ids == b, val, 0.0)

    acc = jax.lax.fori_loop(0, n_valid, body, jnp.zeros((1, bt), jnp.float32))
    out_ref[...] = acc.astype(out_ref.dtype)


def age_regressor_forward(x, w1, b1, w2, b2, spatial_size=(7, 7), batch_tile=128):
    """x: (B, C, T, H, W). Returns (B,) float32."""
    # TODO(synk): encoder is an arbitrary injected module; treated as identity here.
    B, C, T, H, W = x.shape
    # With (H, W) == spatial_size the adaptive spatial pooling is an identity and
    # the 3D adaptive pool reduces exactly to a temporal mean (PyTorch semantics).
    assert (H, W) == tuple(spatial_size)
    HW = H * W
    CT = C * T
    HID = w1.shape[0]          # 128
    assert w1.shape == (HID, C) and b1.shape == (HID,)
    assert w2.shape == (1, HID) and b2.shape == (1,)

    # ---- batch-tile selection against a VMEM budget (x is double-buffered) ----
    itemsize = jnp.dtype(x.dtype).itemsize
    lane_pad = -(-HW // 128) * 128          # lanes pad to 128
    sub_pad = -(-CT // 8) * 8               # sublanes pad to 8 (dense: CT mult of 8 typ.)
    per_sample_vmem = sub_pad * lane_pad * itemsize
    x_budget = 36 << 20                     # bytes for the two x buffers (v7x-safe)
    bt = max(1, min(int(batch_tile), B, x_budget // (2 * per_sample_vmem)))
    if B <= bt and B >= 16:
        bt = -(-B // 2)                     # >= 2 grid steps so both v7x cores get work
    num_tiles = pl.cdiv(B, bt)
    vmem_limit = int(min(max(2 * bt * per_sample_vmem + (12 << 20), 32 << 20), 48 << 20))

    # Free, contiguous reshape only — no pad, no cast, no extra HBM pass over x.
    x_r = x.reshape(B, CT, HW)

    # Fold the mean scale factors into the (tiny) constant weights on the host.
    # W1e[:, c*T + t] = w1[:, c] / T   (temporal mean folded into the contraction)
    w1e = (jnp.repeat(jnp.asarray(w1, jnp.float32), T, axis=1) / float(T)).astype(x.dtype)
    b1c = jnp.asarray(b1, jnp.float32).reshape(HID, 1)                 # (128, 1)
    w2c = jnp.asarray(w2, jnp.float32).reshape(HID, 1) / float(HW)     # (128, 1)

    kernel = functools.partial(_age_regressor_kernel, B)
    out = pl.pallas_call(
        kernel,
        out_shape=jax.ShapeDtypeStruct((num_tiles, bt), jnp.float32),
        grid_spec=pltpu.PrefetchScalarGridSpec(
            num_scalar_prefetch=0,
            grid=(num_tiles,),
            in_specs=[
                pl.BlockSpec((bt, CT, HW), lambda i: (i, 0, 0)),
                pl.BlockSpec((HID, CT), lambda i: (0, 0)),
                pl.BlockSpec((HID, 1), lambda i: (0, 0)),
                pl.BlockSpec((HID, 1), lambda i: (0, 0)),
            ],
            # One lane-dense (1, bt) block per grid step (not grid-resident).
            out_specs=pl.BlockSpec((1, bt), lambda i: (i, 0)),
        ),
        compiler_params=pltpu.CompilerParams(
            dimension_semantics=("parallel",),
            vmem_limit_bytes=vmem_limit),
    )(x_r, w1e, b1c, w2c)

    # Final Linear bias applied on the (B,) result host-side (removes a padded
    # (1,1) VMEM tile + double buffer from the kernel).
    return out.reshape(num_tiles * bt)[:B] + jnp.asarray(b2, jnp.float32)[0]


def _reference_forward(x, w1, b1, w2, b2):
    """Pure-JAX reference mirroring the PyTorch module (encoder = identity)."""
    z = jnp.mean(jnp.asarray(x, jnp.float32), axis=2)              # (B, C, H, W)
    h = jnp.einsum("bchw,kc->bkhw", z, w1) + b1[None, :, None, None]
    h = jnp.maximum(h, 0.0)
    pooled = jnp.mean(h, axis=(2, 3))                              # (B, 128)
    out = pooled @ w2.T + b2                                       # (B, 1)
    return out[:, 0]


if __name__ == "__main__":
    # Small shapes consistent with the forward pass: (B, C, T, H, W)
    B, C, T, H, W = 2, 64, 4, 7, 7
    HID = 128

    key = jax.random.PRNGKey(0)
    kx, kw1, kb1, kw2, kb2 = jax.random.split(key, 5)
    x = jax.random.normal(kx, (B, C, T, H, W), dtype=jnp.float32)

    # Deterministic synthetic parameters (shapes from the module's __init__).
    w1 = jax.random.normal(kw1, (HID, C), dtype=jnp.float32) * 0.05   # Conv2d(C,128,1) weight
    b1 = jax.random.normal(kb1, (HID,), dtype=jnp.float32) * 0.05     # Conv2d bias
    w2 = jax.random.normal(kw2, (1, HID), dtype=jnp.float32) * 0.05   # Linear(128,1) weight
    b2 = jax.random.normal(kb2, (1,), dtype=jnp.float32) * 0.05       # Linear bias

    out = age_regressor_forward(x, w1, b1, w2, b2)
    out = jax.block_until_ready(out)

    ref = _reference_forward(x, w1, b1, w2, b2)
    assert out.shape == (B,)
    assert jnp.allclose(out, ref, atol=1e-4, rtol=1e-4), (out, ref)

    print("KERNEL_OK")
</pallas_src>

<mosaic_0001>
module attributes {stable_mosaic.version = 11 : i64} {
  func.func @_age_regressor_kernel(%arg0: i32, %arg1: memref<2x256x49xf32, #tpu.memory_space<vmem>>, %arg2: memref<128x256xf32, #tpu.memory_space<vmem>>, %arg3: memref<128x1xf32, #tpu.memory_space<vmem>>, %arg4: memref<128x1xf32, #tpu.memory_space<vmem>>, %arg5: memref<1x2xf32, #tpu.memory_space<vmem>>) attributes {dimension_semantics = [#tpu.dimension_semantics<parallel>], iteration_bounds = array<i64: 1>, scalar_prefetch = 0 : i64, scratch_operands = 0 : i64, tpu.core_type = #tpu.core_type<tc>, window_params = [{transform_indices = @transform_0, window_bounds = array<i64: 2, 256, 49>}, {pipeline_mode = #tpu.pipeline_mode<synchronous>, transform_indices = @transform_1, window_bounds = array<i64: 128, 256>}, {pipeline_mode = #tpu.pipeline_mode<synchronous>, transform_indices = @transform_2, window_bounds = array<i64: 128, 1>}, {pipeline_mode = #tpu.pipeline_mode<synchronous>, transform_indices = @transform_3, window_bounds = array<i64: 128, 1>}, {transform_indices = @transform_4, window_bounds = array<i64: 1, 2>}]} {
    %c2_i32 = arith.constant 2 : i32
    %0 = arith.muli %arg0, %c2_i32 : i32
    %c2_i32_0 = arith.constant 2 : i32
    %1 = arith.subi %c2_i32_0, %0 : i32
    %c2_i32_1 = arith.constant 2 : i32
    %2 = arith.minsi %c2_i32_1, %1 : i32
    %3 = tpu.iota {dimensions = array<i32: 1>} : vector<1x2xi32>
    %cst = arith.constant 0.000000e+00 : f32
    %4 = vector.broadcast %cst : f32 to vector<1x2xf32>
    %c0_i32 = arith.constant 0 : i32
    %5 = arith.subi %2, %c0_i32 : i32
    %6 = arith.addi %c0_i32, %5 : i32
    %c1_i32 = arith.constant 1 : i32
    %7 = scf.for %arg6 = %c0_i32 to %6 step %c1_i32 iter_args(%arg7 = %4) -> (vector<1x2xf32>)  : i32 {
      %9 = arith.index_cast %arg6 : i32 to index
      %c0_3 = arith.constant 0 : index
      %c0_4 = arith.constant 0 : index
      %10 = vector.load %arg1[%9, %c0_3, %c0_4] : memref<2x256x49xf32, #tpu.memory_space<vmem>>, vector<1x256x49xf32>
      %11 = vector.shape_cast %10 : vector<1x256x49xf32> to vector<256x49xf32>
      %c0_5 = arith.constant 0 : index
      %c0_6 = arith.constant 0 : index
      %12 = vector.load %arg2[%c0_5, %c0_6] : memref<128x256xf32, #tpu.memory_space<vmem>>, vector<128x256xf32>
      %cst_7 = arith.constant dense<0.000000e+00> : vector<128x49xf32>
      %13 = tpu.matmul %12, %11, %cst_7 {dimension_numbers = #tpu.dot_dimension_numbers<[1], [0], [0], [1], [0, 0, 1, 1], [], []>} : vector<128x256xf32>, vector<256x49xf32>, vector<128x49xf32> -> vector<128x49xf32>
      %c0_8 = arith.constant 0 : index
      %c0_9 = arith.constant 0 : index
      %14 = vector.load %arg3[%c0_8, %c0_9] : memref<128x1xf32, #tpu.memory_space<vmem>>, vector<128x1xf32>
      %15 = vector.broadcast %14 : vector<128x1xf32> to vector<128x49xf32>
      %16 = arith.addf %13, %15 : vector<128x49xf32>
      %cst_10 = arith.constant 0.000000e+00 : f32
      %17 = vector.broadcast %cst_10 : f32 to vector<128x49xf32>
      %18 = arith.maximumf %16, %17 : vector<128x49xf32>
      %c0_11 = arith.constant 0 : index
      %c0_12 = arith.constant 0 : index
      %19 = vector.load %arg4[%c0_11, %c0_12] : memref<128x1xf32, #tpu.memory_space<vmem>>, vector<128x1xf32>
      %20 = vector.broadcast %19 : vector<128x1xf32> to vector<128x49xf32>
      %21 = arith.mulf %18, %20 : vector<128x49xf32>
      %cst_13 = arith.constant dense<0.000000e+00> : vector<128xf32>
      %22 = vector.multi_reduction <add>, %21, %cst_13 [1] : vector<128x49xf32> to vector<128xf32>
      %23 = vector.shape_cast %22 : vector<128xf32> to vector<128x1xf32>
      %cst_14 = arith.constant dense<0.000000e+00> : vector<1xf32>
      %24 = vector.multi_reduction <add>, %23, %cst_14 [0] : vector<128x1xf32> to vector<1xf32>
      %25 = vector.shape_cast %24 : vector<1xf32> to vector<1x1xf32>
      %26 = vector.broadcast %arg6 : i32 to vector<1x2xi32>
      %27 = arith.cmpi eq, %3, %26 : vector<1x2xi32>
      %cst_15 = arith.constant 0.000000e+00 : f32
      %28 = vector.shape_cast %25 : vector<1x1xf32> to vector<1x1xf32>
      %29 = vector.broadcast %28 : vector<1x1xf32> to vector<1x2xf32>
      %30 = vector.broadcast %cst_15 : f32 to vector<1x2xf32>
      %31 = arith.select %27, %29, %30 : vector<1x2xi1>, vector<1x2xf32>
      %32 = arith.addf %arg7, %31 : vector<1x2xf32>
      scf.yield %32 : vector<1x2xf32>
    }
    %c0 = arith.constant 0 : index
    %c0_2 = arith.constant 0 : index
    %8 = vector.load %arg5[%c0, %c0_2] : memref<1x2xf32, #tpu.memory_space<vmem>>, vector<1x2xf32>
    tpu.vector_store %arg5[%c0, %c0_2], %7 {strides = array<i32>} : memref<1x2xf32, #tpu.memory_space<vmem>>, vector<1x2xf32>,
    return
  }
  func.func @transform_0(%arg0: i32) -> (i32, i32, i32) {
    %c0_i32 = arith.constant 0 : i32
    %c0_i32_0 = arith.constant 0 : i32
    %c0_i32_1 = arith.constant 0 : i32
    return %arg0, %c0_i32, %c0_i32_0 : i32, i32, i32
  }
  func.func @transform_1(%arg0: i32) -> (i32, i32) {
    %c0_i32 = arith.constant 0 : i32
    %c0_i32_0 = arith.constant 0 : i32
    %c0_i32_1 = arith.constant 0 : i32
    return %c0_i32, %c0_i32_0 : i32, i32
  }
  func.func @transform_2(%arg0: i32) -> (i32, i32) {
    %c0_i32 = arith.constant 0 : i32
    %c0_i32_0 = arith.constant 0 : i32
    %c0_i32_1 = arith.constant 0 : i32
    return %c0_i32, %c0_i32_0 : i32, i32
  }
  func.func @transform_3(%arg0: i32) -> (i32, i32) {
    %c0_i32 = arith.constant 0 : i32
    %c0_i32_0 = arith.constant 0 : i32
    %c0_i32_1 = arith.constant 0 : i32
    return %c0_i32, %c0_i32_0 : i32, i32
  }
  func.func @transform_4(%arg0: i32) -> (i32, i32) {
    %c0_i32 = arith.constant 0 : i32
    %c0_i32_0 = arith.constant 0 : i32
    return %arg0, %c0_i32 : i32, i32
  }
}

</mosaic_0001>

<llo_original>
// kernel: tpu_custom_call.1
$region0: #{tpu_custom_call.1}
  #allocation0 [shape = 'u32[]', space=smem, size = 0x4, offset = 0x4, fixed_abs, tag = 'smem constant byte address 0x4 - core index']
  #allocation1 [shape = 'u32[144,128]{1,0:T(1,128)}', space=vmem, size = 0x12000, scoped, tag = 'internal scratch']
  %s0 = inlined_call_operand.vmem [shape: f32[2,256,49], index: 0, kind: input, shape index: {}]
  %s1 = inlined_call_operand.vmem [shape: f32[128,256], index: 1, kind: input, shape index: {}]
  %s2 = inlined_call_operand.vmem [shape: f32[128,1], index: 2, kind: input, shape index: {}]
  %s3 = inlined_call_operand.vmem [shape: f32[128,1], index: 3, kind: input, shape index: {}]
  %s4 = inlined_call_operand.hbm [shape: f32[1,2], index: 4, kind: output, shape index: {}]
  %s5 = sld [smem:[#allocation0]]
  $region33: #{tpu_custom_call.1} parent=0
    _
  %s7 = ssub.s32 1, %s5
  %s8 = scalar_select 0, %s7, %s5
  $region1: #{tpu_custom_call.1} parent=0
    #allocation2 [shape = 'u8[512]{0}', space=vmem, size = 0x400, scoped, tag = 'output window, operand 0, single buffered']
    #allocation3 [shape = 's32[1]{0}', space=sflag, size = 0x4, scoped, tag = 'scoped memory for tpu_custom_call.1']
    %9 = vsyncpa [#allocation3], 0
    // Predicated region
    $region2: #{tpu_custom_call.1} parent=1 // pred_check
      _
    $region3: #{tpu_custom_call.1} parent=1 // pred_check_branch
      %11 = sbr.rel (0) target = $region5
    $region4: #{tpu_custom_call.1} parent=1 // pred_region
      _
    $region5: #{tpu_custom_call.1} parent=1 // pred_fallthru
      _
    // Predicated region
    $region6: #{tpu_custom_call.1} parent=1 // pred_check
      _
    $region7: #{tpu_custom_call.1} parent=1 // pred_check_branch
      %13 = sbr.rel (0) target = $region9
    $region8: #{tpu_custom_call.1} parent=1 // pred_region
      _
    $region9: #{tpu_custom_call.1} parent=1 // pred_fallthru
      _
    // Predicated region
    $region10: #{tpu_custom_call.1} parent=1 // pred_check
      _
    $region11: #{tpu_custom_call.1} parent=1 // pred_check_branch
      %15 = sbr.rel (0) target = $region13
    $region12: #{tpu_custom_call.1} parent=1 // pred_region
      _
    $region13: #{tpu_custom_call.1} parent=1 // pred_fallthru
      _
    // Predicated region
    $region14: #{tpu_custom_call.1} parent=1 // pred_check
      _
    $region15: #{tpu_custom_call.1} parent=1 // pred_check_branch
      %17 = sbr.rel (0) target = $region17
    $region16: #{tpu_custom_call.1} parent=1 // pred_region
      _
    $region17: #{tpu_custom_call.1} parent=1 // pred_fallthru
      _
    %s18 = smul.u32 0, 2
    %s19 = ssub.s32 2, %s18
    %p20 = scmp.lt.s32.totalorder %s19, 2
    %s21 = scalar_select %p20, %s19, 2
    %v22 = vlaneseq
    %v23 = vand.u32 %v22, 127
    // While loop
    $region18: #{tpu_custom_call.1} parent=1 // loop_pre_header
      _
    $region19: #{tpu_custom_call.1} parent=1 // loop_header
      %s25 = sphi 0, %s27
      %p26 = scmp.ge.s32.totalorder %s25, %s21
      %v30 = vphi 0.0, %v539
    $region20: #{tpu_custom_call.1} parent=1 // loop_header_branch
      %29 = sbr.rel (%p26) target = $region24
    $region21: #{tpu_custom_call.1} parent=1 // loop_body
      %s31 = smul.u32 %s25, 256
      %s32 = scalar_lea.vmem %s0, %s31
      %v33 = vld [vmem:[%s32] sm:$0xff]
      %v34 = vld [vmem:[%s32 + $0x8] sm:$0xff]
      %v35 = vld [vmem:[%s32 + $0x10] sm:$0xff]
      %v36 = vld [vmem:[%s32 + $0x18] sm:$0xff]
      %v37 = vld [vmem:[%s32 + $0x20] sm:$0xff]
      %v38 = vld [vmem:[%s32 + $0x28] sm:$0xff]
      %v39 = vld [vmem:[%s32 + $0x30] sm:$0xff]
      %v40 = vld [vmem:[%s32 + $0x38] sm:$0xff]
      %v41 = vld [vmem:[%s32 + $0x40] sm:$0xff]
      %v42 = vld [vmem:[%s32 + $0x48] sm:$0xff]
      %v43 = vld [vmem:[%s32 + $0x50] sm:$0xff]
      %v44 = vld [vmem:[%s32 + $0x58] sm:$0xff]
      %v45 = vld [vmem:[%s32 + $0x60] sm:$0xff]
      %v46 = vld [vmem:[%s32 + $0x68] sm:$0xff]
      %v47 = vld [vmem:[%s32 + $0x70] sm:$0xff]
      %v48 = vld [vmem:[%s32 + $0x78] sm:$0xff]
      %v49 = vld [vmem:[%s32 + $0x80] sm:$0xff]
      %v50 = vld [vmem:[%s32 + $0x88] sm:$0xff]
      %v51 = vld [vmem:[%s32 + $0x90] sm:$0xff]
      %v52 = vld [vmem:[%s32 + $0x98] sm:$0xff]
      %v53 = vld [vmem:[%s32 + $0xa0] sm:$0xff]
      %v54 = vld [vmem:[%s32 + $0xa8] sm:$0xff]
      %v55 = vld [vmem:[%s32 + $0xb0] sm:$0xff]
      %v56 = vld [vmem:[%s32 + $0xb8] sm:$0xff]
      %v57 = vld [vmem:[%s32 + $0xc0] sm:$0xff]
      %v58 = vld [vmem:[%s32 + $0xc8] sm:$0xff]
      %v59 = vld [vmem:[%s32 + $0xd0] sm:$0xff]
      %v60 = vld [vmem:[%s32 + $0xd8] sm:$0xff]
      %v61 = vld [vmem:[%s32 + $0xe0] sm:$0xff]
      %v62 = vld [vmem:[%s32 + $0xe8] sm:$0xff]
      %v63 = vld [vmem:[%s32 + $0xf0] sm:$0xff]
      %v64 = vld [vmem:[%s32 + $0xf8] sm:$0xff]
      %v65 = vld [vmem:[%s1] sm:$0xff]
      %v66 = vld [vmem:[%s1 + $0x8] sm:$0xff]
      %v67 = vld [vmem:[%s1 + $0x10] sm:$0xff]
      %v68 = vld [vmem:[%s1 + $0x18] sm:$0xff]
      %v69 = vld [vmem:[%s1 + $0x20] sm:$0xff]
      %v70 = vld [vmem:[%s1 + $0x28] sm:$0xff]
      %v71 = vld [vmem:[%s1 + $0x30] sm:$0xff]
      %v72 = vld [vmem:[%s1 + $0x38] sm:$0xff]
      %v73 = vld [vmem:[%s1 + $0x40] sm:$0xff]
      %v74 = vld [vmem:[%s1 + $0x48] sm:$0xff]
      %v75 = vld [vmem:[%s1 + $0x50] sm:$0xff]
      %v76 = vld [vmem:[%s1 + $0x58] sm:$0xff]
      %v77 = vld [vmem:[%s1 + $0x60] sm:$0xff]
      %v78 = vld [vmem:[%s1 + $0x68] sm:$0xff]
      %v79 = vld [vmem:[%s1 + $0x70] sm:$0xff]
      %v80 = vld [vmem:[%s1 + $0x78] sm:$0xff]
      %v81 = vld [vmem:[%s1 + $0x80] sm:$0xff]
      %v82 = vld [vmem:[%s1 + $0x88] sm:$0xff]
      %v83 = vld [vmem:[%s1 + $0x90] sm:$0xff]
      %v84 = vld [vmem:[%s1 + $0x98] sm:$0xff]
      %v85 = vld [vmem:[%s1 + $0xa0] sm:$0xff]
      %v86 = vld [vmem:[%s1 + $0xa8] sm:$0xff]
      %v87 = vld [vmem:[%s1 + $0xb0] sm:$0xff]
      %v88 = vld [vmem:[%s1 + $0xb8] sm:$0xff]
      %v89 = vld [vmem:[%s1 + $0xc0] sm:$0xff]
      %v90 = vld [vmem:[%s1 + $0xc8] sm:$0xff]
      %v91 = vld [vmem:[%s1 + $0xd0] sm:$0xff]
      %v92 = vld [vmem:[%s1 + $0xd8] sm:$0xff]
      %v93 = vld [vmem:[%s1 + $0xe0] sm:$0xff]
      %v94 = vld [vmem:[%s1 + $0xe8] sm:$0xff]
      %v95 = vld [vmem:[%s1 + $0xf0] sm:$0xff]
      %v96 = vld [vmem:[%s1 + $0xf8] sm:$0xff]
      %v97 = vld [vmem:[%s2] sm:$0xff]
      %v98 = vld [vmem:[%s2 + $0x8] sm:$0xff]
      %v99 = vld [vmem:[%s2 + $0x10] sm:$0xff]
      %v100 = vld [vmem:[%s2 + $0x18] sm:$0xff]
      %v101 = vld [vmem:[%s2 + $0x20] sm:$0xff]
      %v102 = vld [vmem:[%s2 + $0x28] sm:$0xff]
      %v103 = vld [vmem:[%s2 + $0x30] sm:$0xff]
      %v104 = vld [vmem:[%s2 + $0x38] sm:$0xff]
      %v105 = vld [vmem:[%s2 + $0x40] sm:$0xff]
      %v106 = vld [vmem:[%s2 + $0x48] sm:$0xff]
      %v107 = vld [vmem:[%s2 + $0x50] sm:$0xff]
      %v108 = vld [vmem:[%s2 + $0x58] sm:$0xff]
      %v109 = vld [vmem:[%s2 + $0x60] sm:$0xff]
      %v110 = vld [vmem:[%s2 + $0x68] sm:$0xff]
      %v111 = vld [vmem:[%s2 + $0x70] sm:$0xff]
      %v112 = vld [vmem:[%s2 + $0x78] sm:$0xff]
      %114 = vset.pattern.permute.xlu0 0
      %115 = vperm.xlu0 %114, %v97
      %v116 = vpop.permute.xlu0 %115
      %119 = vset.pattern.permute.xlu0 0
      %120 = vperm.xlu0 %119, %v98
      %v121 = vpop.permute.xlu0 %120
      %124 = vset.pattern.permute.xlu0 0
      %125 = vperm.xlu0 %124, %v99
      %v126 = vpop.permute.xlu0 %125
      %129 = vset.pattern.permute.xlu0 0
      %130 = vperm.xlu0 %129, %v100
      %v131 = vpop.permute.xlu0 %130
      %134 = vset.pattern.permute.xlu0 0
      %135 = vperm.xlu0 %134, %v101
      %v136 = vpop.permute.xlu0 %135
      %139 = vset.pattern.permute.xlu0 0
      %140 = vperm.xlu0 %139, %v102
      %v141 = vpop.permute.xlu0 %140
      %144 = vset.pattern.permute.xlu0 0
      %145 = vperm.xlu0 %144, %v103
      %v146 = vpop.permute.xlu0 %145
      %149 = vset.pattern.permute.xlu0 0
      %150 = vperm.xlu0 %149, %v104
      %v151 = vpop.permute.xlu0 %150
      %154 = vset.pattern.permute.xlu0 0
      %155 = vperm.xlu0 %154, %v105
      %v156 = vpop.permute.xlu0 %155
      %159 = vset.pattern.permute.xlu0 0
      %160 = vperm.xlu0 %159, %v106
      %v161 = vpop.permute.xlu0 %160
      %164 = vset.pattern.permute.xlu0 0
      %165 = vperm.xlu0 %164, %v107
      %v166 = vpop.permute.xlu0 %165
      %169 = vset.pattern.permute.xlu0 0
      %170 = vperm.xlu0 %169, %v108
      %v171 = vpop.permute.xlu0 %170
      %174 = vset.pattern.permute.xlu0 0
      %175 = vperm.xlu0 %174, %v109
      %v176 = vpop.permute.xlu0 %175
      %179 = vset.pattern.permute.xlu0 0
      %180 = vperm.xlu0 %179, %v110
      %v181 = vpop.permute.xlu0 %180
      %184 = vset.pattern.permute.xlu0 0
      %185 = vperm.xlu0 %184, %v111
      %v186 = vpop.permute.xlu0 %185
      %189 = vset.pattern.permute.xlu0 0
      %190 = vperm.xlu0 %189, %v112
      %v191 = vpop.permute.xlu0 %190
      %193 = vmatprep.subr.mxu0 0.0
      %194 = vmatpush1.msra.mxu0 %v33
      %195 = vmatprep.subr.mxu0 0.0
      %196 = vmatpush1.msra.mxu0 %v34
      %197 = vmatprep.subr.mxu0 0.0
      %198 = vmatpush1.msra.mxu0 %v35
      %199 = vmatprep.subr.mxu0 0.0
      %200 = vmatpush1.msra.mxu0 %v36
      %201 = vmatprep.subr.mxu0 0.0
      %202 = vmatpush1.msra.mxu0 %v37
      %203 = vmatprep.subr.mxu0 0.0
      %204 = vmatpush1.msra.mxu0 %v38
      %205 = vmatprep.subr.mxu0 0.0
      %206 = vmatpush1.msra.mxu0 %v39
      %207 = vmatprep.subr.mxu0 0.0
      %208 = vmatpush1.msra.mxu0 %v40
      %209 = vmatprep.subr.mxu0 0.0
      %210 = vmatpush1.msra.mxu0 %v41
      %211 = vmatprep.subr.mxu0 0.0
      %212 = vmatpush1.msra.mxu0 %v42
      %213 = vmatprep.subr.mxu0 0.0
      %214 = vmatpush1.msra.mxu0 %v43
      %215 = vmatprep.subr.mxu0 0.0
      %216 = vmatpush1.msra.mxu0 %v44
      %217 = vmatprep.subr.mxu0 0.0
      %218 = vmatpush1.msra.mxu0 %v45
      %219 = vmatprep.subr.mxu0 0.0
      %220 = vmatpush1.msra.mxu0 %v46
      %221 = vmatprep.subr.mxu0 0.0
      %222 = vmatpush1.msra.mxu0 %v47
      %223 = vmatprep.subr.mxu0 0.0
      %224 = vmatpush1.msra.mxu0 %v48
      %225 = vmatprep.subr.mxu0 0.0
      %226 = vmatpush1.msra.mxu0 %v49
      %227 = vmatprep.subr.mxu0 0.0
      %228 = vmatpush1.msra.mxu0 %v50
      %229 = vmatprep.subr.mxu0 0.0
      %230 = vmatpush1.msra.mxu0 %v51
      %231 = vmatprep.subr.mxu0 0.0
      %232 = vmatpush1.msra.mxu0 %v52
      %233 = vmatprep.subr.mxu0 0.0
      %234 = vmatpush1.msra.mxu0 %v53
      %235 = vmatprep.subr.mxu0 0.0
      %236 = vmatpush1.msra.mxu0 %v54
      %237 = vmatprep.subr.mxu0 0.0
      %238 = vmatpush1.msra.mxu0 %v55
      %239 = vmatprep.subr.mxu0 0.0
      %240 = vmatpush1.msra.mxu0 %v56
      %241 = vmatprep.subr.mxu0 0.0
      %242 = vmatpush1.msra.mxu0 %v57
      %243 = vmatprep.subr.mxu0 0.0
      %244 = vmatpush1.msra.mxu0 %v58
      %245 = vmatprep.subr.mxu0 0.0
      %246 = vmatpush1.msra.mxu0 %v59
      %247 = vmatprep.subr.mxu0 0.0
      %248 = vmatpush1.msra.mxu0 %v60
      %249 = vmatprep.subr.mxu0 0.0
      %250 = vmatpush1.msra.mxu0 %v61
      %251 = vmatprep.subr.mxu0 0.0
      %252 = vmatpush1.msra.mxu0 %v62
      %253 = vmatprep.subr.mxu0 0.0
      %254 = vmatpush1.msra.mxu0 %v63
      %255 = vmatprep.subr.mxu0 0.0
      %256 = vmatpush1.msra.mxu0 %v64
      %257 = vmatprep.mubr.f32.mxu0 %v66
      %258 = vmatmul.mubr.f32.gmra.mrb[0].mxu0 %v65
      %v259 = vpop.f32.mrb[0].mxu0
      %v260 = vadd.f32 %v116, %v259
      %v261 = vpop.f32.mrb[0].mxu0
      %262 = vmatprep.mubr.f32.mxu0 %v68
      %263 = vmatmul.mubr.f32.gmra.mrb[0].mxu0 %v67
      %v264 = vpop.f32.mrb[0].mxu0
      %v265 = vadd.f32 %v121, %v264
      %v266 = vpop.f32.mrb[0].mxu0
      %267 = vmatprep.mubr.f32.mxu0 %v70
      %268 = vmatmul.mubr.f32.gmra.mrb[0].mxu0 %v69
      %v269 = vpop.f32.mrb[0].mxu0
      %v270 = vadd.f32 %v126, %v269
      %v271 = vpop.f32.mrb[0].mxu0
      %272 = vmatprep.mubr.f32.mxu0 %v72
      %273 = vmatmul.mubr.f32.gmra.mrb[0].mxu0 %v71
      %v274 = vpop.f32.mrb[0].mxu0
      %v275 = vadd.f32 %v131, %v274
      %v276 = vpop.f32.mrb[0].mxu0
      %277 = vmatprep.mubr.f32.mxu0 %v74
      %278 = vmatmul.mubr.f32.gmra.mrb[0].mxu0 %v73
      %v279 = vpop.f32.mrb[0].mxu0
      %v280 = vadd.f32 %v136, %v279
      %v281 = vpop.f32.mrb[0].mxu0
      %282 = vmatprep.mubr.f32.mxu0 %v76
      %283 = vmatmul.mubr.f32.gmra.mrb[0].mxu0 %v75
      %v284 = vpop.f32.mrb[0].mxu0
      %v285 = vadd.f32 %v141, %v284
      %v286 = vpop.f32.mrb[0].mxu0
      %287 = vmatprep.mubr.f32.mxu0 %v78
      %288 = vmatmul.mubr.f32.gmra.mrb[0].mxu0 %v77
      %v289 = vpop.f32.mrb[0].mxu0
      %v290 = vadd.f32 %v146, %v289
      %v291 = vpop.f32.mrb[0].mxu0
      %292 = vmatprep.mubr.f32.mxu0 %v80
      %293 = vmatmul.mubr.f32.gmra.mrb[0].mxu0 %v79
      %v294 = vpop.f32.mrb[0].mxu0
      %v295 = vadd.f32 %v151, %v294
      %v296 = vpop.f32.mrb[0].mxu0
      %297 = vmatprep.mubr.f32.mxu0 %v82
      %298 = vmatmul.mubr.f32.gmra.mrb[0].mxu0 %v81
      %v299 = vpop.f32.mrb[0].mxu0
      %v300 = vadd.f32 %v156, %v299
      %v301 = vpop.f32.mrb[0].mxu0
      %302 = vmatprep.mubr.f32.mxu0 %v84
      %303 = vmatmul.mubr.f32.gmra.mrb[0].mxu0 %v83
      %v304 = vpop.f32.mrb[0].mxu0
      %v305 = vadd.f32 %v161, %v304
      %v306 = vpop.f32.mrb[0].mxu0
      %307 = vmatprep.mubr.f32.mxu0 %v86
      %308 = vmatmul.mubr.f32.gmra.mrb[0].mxu0 %v85
      %v309 = vpop.f32.mrb[0].mxu0
      %v310 = vadd.f32 %v166, %v309
      %v311 = vpop.f32.mrb[0].mxu0
      %312 = vmatprep.mubr.f32.mxu0 %v88
      %313 = vmatmul.mubr.f32.gmra.mrb[0].mxu0 %v87
      %v314 = vpop.f32.mrb[0].mxu0
      %v315 = vadd.f32 %v171, %v314
      %v316 = vpop.f32.mrb[0].mxu0
      %317 = vmatprep.mubr.f32.mxu0 %v90
      %318 = vmatmul.mubr.f32.gmra.mrb[0].mxu0 %v89
      %v319 = vpop.f32.mrb[0].mxu0
      %v320 = vadd.f32 %v176, %v319
      %v321 = vpop.f32.mrb[0].mxu0
      %322 = vmatprep.mubr.f32.mxu0 %v92
      %323 = vmatmul.mubr.f32.gmra.mrb[0].mxu0 %v91
      %v324 = vpop.f32.mrb[0].mxu0
      %v325 = vadd.f32 %v181, %v324
      %v326 = vpop.f32.mrb[0].mxu0
      %327 = vmatprep.mubr.f32.mxu0 %v94
      %328 = vmatmul.mubr.f32.gmra.mrb[0].mxu0 %v93
      %v329 = vpop.f32.mrb[0].mxu0
      %v330 = vadd.f32 %v186, %v329
      %v331 = vpop.f32.mrb[0].mxu0
      %332 = vmatprep.mubr.f32.mxu0 %v96
      %333 = vmatmul.mubr.f32.gmra.mrb[0].mxu0 %v95
      %v334 = vpop.f32.mrb[0].mxu0
      %v335 = vadd.f32 %v191, %v334
      %v336 = vpop.f32.mrb[0].mxu0
      %337 = vdwg.mxu0
      %v338 = vmax.f32 %v260, 0.0
      %v339 = vmax.f32 %v265, 0.0
      %v340 = vmax.f32 %v270, 0.0
      %v341 = vmax.f32 %v275, 0.0
      %v342 = vmax.f32 %v280, 0.0
      %v343 = vmax.f32 %v285, 0.0
      %v344 = vmax.f32 %v290, 0.0
      %v345 = vmax.f32 %v295, 0.0
      %v346 = vmax.f32 %v300, 0.0
      %v347 = vmax.f32 %v305, 0.0
      %v348 = vmax.f32 %v310, 0.0
      %v349 = vmax.f32 %v315, 0.0
      %v350 = vmax.f32 %v320, 0.0
      %v351 = vmax.f32 %v325, 0.0
      %v352 = vmax.f32 %v330, 0.0
      %v353 = vmax.f32 %v335, 0.0
      %v354 = vld [vmem:[%s3] sm:$0xff]
      %v355 = vld [vmem:[%s3 + $0x8] sm:$0xff]
      %v356 = vld [vmem:[%s3 + $0x10] sm:$0xff]
      %v357 = vld [vmem:[%s3 + $0x18] sm:$0xff]
      %v358 = vld [vmem:[%s3 + $0x20] sm:$0xff]
      %v359 = vld [vmem:[%s3 + $0x28] sm:$0xff]
      %v360 = vld [vmem:[%s3 + $0x30] sm:$0xff]
      %v361 = vld [vmem:[%s3 + $0x38] sm:$0xff]
      %v362 = vld [vmem:[%s3 + $0x40] sm:$0xff]
      %v363 = vld [vmem:[%s3 + $0x48] sm:$0xff]
      %v364 = vld [vmem:[%s3 + $0x50] sm:$0xff]
      %v365 = vld [vmem:[%s3 + $0x58] sm:$0xff]
      %v366 = vld [vmem:[%s3 + $0x60] sm:$0xff]
      %v367 = vld [vmem:[%s3 + $0x68] sm:$0xff]
      %v368 = vld [vmem:[%s3 + $0x70] sm:$0xff]
      %v369 = vld [vmem:[%s3 + $0x78] sm:$0xff]
      %371 = vset.pattern.permute.xlu0 0
      %372 = vperm.xlu0 %371, %v354
      %v373 = vpop.permute.xlu0 %372
      %376 = vset.pattern.permute.xlu0 0
      %377 = vperm.xlu0 %376, %v355
      %v378 = vpop.permute.xlu0 %377
      %381 = vset.pattern.permute.xlu0 0
      %382 = vperm.xlu0 %381, %v356
      %v383 = vpop.permute.xlu0 %382
      %386 = vset.pattern.permute.xlu0 0
      %387 = vperm.xlu0 %386, %v357
      %v388 = vpop.permute.xlu0 %387
      %391 = vset.pattern.permute.xlu0 0
      %392 = vperm.xlu0 %391, %v358
      %v393 = vpop.permute.xlu0 %392
      %396 = vset.pattern.permute.xlu0 0
      %397 = vperm.xlu0 %396, %v359
      %v398 = vpop.permute.xlu0 %397
      %401 = vset.pattern.permute.xlu0 0
      %402 = vperm.xlu0 %401, %v360
      %v403 = vpop.permute.xlu0 %402
      %406 = vset.pattern.permute.xlu0 0
      %407 = vperm.xlu0 %406, %v361
      %v408 = vpop.permute.xlu0 %407
      %411 = vset.pattern.permute.xlu0 0
      %412 = vperm.xlu0 %411, %v362
      %v413 = vpop.permute.xlu0 %412
      %416 = vset.pattern.permute.xlu0 0
      %417 = vperm.xlu0 %416, %v363
      %v418 = vpop.permute.xlu0 %417
      %421 = vset.pattern.permute.xlu0 0
      %422 = vperm.xlu0 %421, %v364
      %v423 = vpop.permute.xlu0 %422
      %426 = vset.pattern.permute.xlu0 0
      %427 = vperm.xlu0 %426, %v365
      %v428 = vpop.permute.xlu0 %427
      %431 = vset.pattern.permute.xlu0 0
      %432 = vperm.xlu0 %431, %v366
      %v433 = vpop.permute.xlu0 %432
      %436 = vset.pattern.permute.xlu0 0
      %437 = vperm.xlu0 %436, %v367
      %v438 = vpop.permute.xlu0 %437
      %441 = vset.pattern.permute.xlu0 0
      %442 = vperm.xlu0 %441, %v368
      %v443 = vpop.permute.xlu0 %442
      %446 = vset.pattern.permute.xlu0 0
      %447 = vperm.xlu0 %446, %v369
      %v448 = vpop.permute.xlu0 %447
      %v450 = vmul.f32 %v338, %v373
      %v451 = vmul.f32 %v339, %v378
      %v452 = vmul.f32 %v340, %v383
      %v453 = vmul.f32 %v341, %v388
      %v454 = vmul.f32 %v342, %v393
      %v455 = vmul.f32 %v343, %v398
      %v456 = vmul.f32 %v344, %v403
      %v457 = vmul.f32 %v345, %v408
      %v458 = vmul.f32 %v346, %v413
      %v459 = vmul.f32 %v347, %v418
      %v460 = vmul.f32 %v348, %v423
      %v461 = vmul.f32 %v349, %v428
      %v462 = vmul.f32 %v350, %v433
      %v463 = vmul.f32 %v351, %v438
      %v464 = vmul.f32 %v352, %v443
      %v465 = vmul.f32 %v353, %v448
      %vm466 = vcmask 400384
      %v467 = vsel %vm466, %v450, 0.0
      %468 = vadd.xlane.f32.xlu0 %v467
      %v469 = vpop.xlane.xlu0 %468
      %v470 = vsel %vm466, %v451, 0.0
      %471 = vadd.xlane.f32.xlu0 %v470
      %v472 = vpop.xlane.xlu0 %471
      %v473 = vsel %vm466, %v452, 0.0
      %474 = vadd.xlane.f32.xlu0 %v473
      %v475 = vpop.xlane.xlu0 %474
      %v476 = vsel %vm466, %v453, 0.0
      %477 = vadd.xlane.f32.xlu0 %v476
      %v478 = vpop.xlane.xlu0 %477
      %v479 = vsel %vm466, %v454, 0.0
      %480 = vadd.xlane.f32.xlu0 %v479
      %v481 = vpop.xlane.xlu0 %480
      %v482 = vsel %vm466, %v455, 0.0
      %483 = vadd.xlane.f32.xlu0 %v482
      %v484 = vpop.xlane.xlu0 %483
      %v485 = vsel %vm466, %v456, 0.0
      %486 = vadd.xlane.f32.xlu0 %v485
      %v487 = vpop.xlane.xlu0 %486
      %v488 = vsel %vm466, %v457, 0.0
      %489 = vadd.xlane.f32.xlu0 %v488
      %v490 = vpop.xlane.xlu0 %489
      %v491 = vsel %vm466, %v458, 0.0
      %492 = vadd.xlane.f32.xlu0 %v491
      %v493 = vpop.xlane.xlu0 %492
      %v494 = vsel %vm466, %v459, 0.0
      %495 = vadd.xlane.f32.xlu0 %v494
      %v496 = vpop.xlane.xlu0 %495
      %v497 = vsel %vm466, %v460, 0.0
      %498 = vadd.xlane.f32.xlu0 %v497
      %v499 = vpop.xlane.xlu0 %498
      %v500 = vsel %vm466, %v461, 0.0
      %501 = vadd.xlane.f32.xlu0 %v500
      %v502 = vpop.xlane.xlu0 %501
      %v503 = vsel %vm466, %v462, 0.0
      %504 = vadd.xlane.f32.xlu0 %v503
      %v505 = vpop.xlane.xlu0 %504
      %v506 = vsel %vm466, %v463, 0.0
      %507 = vadd.xlane.f32.xlu0 %v506
      %v508 = vpop.xlane.xlu0 %507
      %v509 = vsel %vm466, %v464, 0.0
      %510 = vadd.xlane.f32.xlu0 %v509
      %v511 = vpop.xlane.xlu0 %510
      %v512 = vsel %vm466, %v465, 0.0
      %513 = vadd.xlane.f32.xlu0 %v512
      %v514 = vpop.xlane.xlu0 %513
      %v515 = vadd.f32 %v469, %v472
      %v516 = vadd.f32 %v515, %v475
      %v517 = vadd.f32 %v516, %v478
      %v518 = vadd.f32 %v517, %v481
      %v519 = vadd.f32 %v518, %v484
      %v520 = vadd.f32 %v519, %v487
      %v521 = vadd.f32 %v520, %v490
      %v522 = vadd.f32 %v521, %v493
      %v523 = vadd.f32 %v522, %v496
      %v524 = vadd.f32 %v523, %v499
      %v525 = vadd.f32 %v524, %v502
      %v526 = vadd.f32 %v525, %v505
      %v527 = vadd.f32 %v526, %v508
      %v528 = vadd.f32 %v527, %v511
      %v529 = vadd.f32 %v528, %v514
      %v530 = vrot.slane %v529, 4
      %v531 = vadd.f32 %v529, %v530
      %v532 = vrot.slane %v531, 2
      %v533 = vadd.f32 %v531, %v532
      %v534 = vrot.slane %v533, 1
      %v535 = vadd.f32 %v533, %v534
      %v536 = vstv %s25
      %vm537 = vcmp.eq.s32.totalorder %v23, %v536
      %v538 = vsel %vm537, %v535, 0.0
      %v539 = vadd.f32 %v30, %v538
    $region22: #{tpu_custom_call.1} parent=1 // loop_footer
      %s27 = sadd.s32 %s25, 1
    $region23: #{tpu_custom_call.1} parent=1 // loop_footer_branch
      %24 = sbr.rel target = $region19
    $region24: #{tpu_custom_call.1} parent=1 // loop_exit
      _
    %vm540 = vcmask 8192
    %541 = vst.msk [vmem:[#allocation2] sm:$0x1] %vm540, %v30
    // Predicated region
    $region25: #{tpu_custom_call.1} parent=1 // pred_check
      _
    $region26: #{tpu_custom_call.1} parent=1 // pred_check_branch
      %543 = sbr.rel (0) target = $region28
    $region27: #{tpu_custom_call.1} parent=1 // pred_region
      %s545 = ssub.s32 16, 16
      %546 = vsyncadd [#allocation3], %s545
      %s548 = sshll.u32 [#allocation2], 4
      %s549 = int_to_ptr.vmem [resolvable:$true] %s548
      %551 = dma.vmem_to_hbm [thread:$0]  %s549, 16, %s4, [#allocation3]
    $region28: #{tpu_custom_call.1} parent=1 // pred_fallthru
      _
    // Predicated region
    $region29: #{tpu_custom_call.1} parent=1 // pred_check
      _
    $region30: #{tpu_custom_call.1} parent=1 // pred_check_branch
      %553 = sbr.rel (0) target = $region32
    $region31: #{tpu_custom_call.1} parent=1 // pred_region
      %554 = dma.done [#allocation3], 16
    $region32: #{tpu_custom_call.1} parent=1 // pred_fallthru
      _
    %555 = vsyncpa [#allocation3], 1

</llo_original>
